<compile_context>
chip_gen: v7x
topology: tpu7x:2x2x1
jax: 0.10.0
libtpu: 0.0.40
codegen_flags: <defaults>
</compile_context>

<pallas_src>
import functools

import jax
import jax.numpy as jnp
from jax.experimental import pallas as pl
from jax.experimental.pallas import tpu as pltpu


def _round_up(x: int, m: int) -> int:
    return ((x + m - 1) // m) * m


def _lora_linear_kernel(scale_ref, x_ref, wT_ref, aT_ref, upT_ref, *rest,
                        has_bias):
    if has_bias:
        b_ref, o_ref, acc_ref, down_ref = rest
    else:
        o_ref, acc_ref, down_ref = rest

    j = pl.program_id(1)
    k = pl.program_id(2)
    n_k = pl.num_programs(2)

    @pl.when(k == 0)
    def _():
        acc_ref[...] = jnp.zeros_like(acc_ref)

    @pl.when((k == 0) & (j == 0))
    def _():
        down_ref[...] = jnp.zeros_like(down_ref)

    x = x_ref[...]                                            # bf16 [tm, tk]

    # Base linear path: accumulate x @ W^T over K tiles (MXU, f32 acc).
    acc_ref[...] += jnp.dot(x, wT_ref[...],
                            preferred_element_type=jnp.float32)

    # LoRA down-projection: x @ A^T, independent of j -> computed only on the
    # first j sweep (j == 0) and reused from scratch for all later j tiles.
    # Skipped entirely when scale == 0 (module's short-circuit).
    @pl.when((j == 0) & (scale_ref[0] != 0.0))
    def _():
        down_ref[...] += jnp.dot(x, aT_ref[...],
                                 preferred_element_type=jnp.float32)

    # Epilogue once per output tile: bias + scale * (down @ B_up^T).
    @pl.when(k == n_k - 1)
    def _():
        base = acc_ref[...]
        if has_bias:
            base = base + b_ref[...]

        @pl.when(scale_ref[0] != 0.0)
        def _():
            up = jnp.dot(down_ref[...], upT_ref[...],
                         preferred_element_type=jnp.float32)  # f32 [tm, tn]
            o_ref[...] = (base + scale_ref[0] * up).astype(o_ref.dtype)

        @pl.when(scale_ref[0] == 0.0)
        def _():
            o_ref[...] = base.astype(o_ref.dtype)


def prepare_lora_linear_params(w, b, a_down, b_up, *, tn=512, tk=512,
                               compute_dtype=jnp.bfloat16):
    """One-time parameter prep: transpose, zero-pad and cast the weights.

    w: [out, in]; b: [out] or None; a_down: [r, in]; b_up: [out, r].
    Do this ONCE per layer, not per forward call.
    """
    out_f, in_f = w.shape
    r = a_down.shape[0]

    tn = min(tn, _round_up(out_f, 128))
    tk = min(tk, _round_up(in_f, 128))
    Np = _round_up(out_f, tn)
    Kp = _round_up(in_f, tk)
    rp = max(_round_up(r, 128), 128)   # full-lane rank padding

    wT = jnp.zeros((Kp, Np), compute_dtype).at[:in_f, :out_f].set(
        w.T.astype(compute_dtype))
    aT = jnp.zeros((Kp, rp), compute_dtype).at[:in_f, :r].set(
        a_down.T.astype(compute_dtype))
    # Up-projection kept in f32 for precision (tiny epilogue matmul).
    upT = jnp.zeros((rp, Np), jnp.float32).at[:r, :out_f].set(
        b_up.T.astype(jnp.float32))
    bias = None
    if b is not None:
        bias = jnp.zeros((1, Np), jnp.float32).at[0, :out_f].set(
            b.astype(jnp.float32))

    return dict(wT=wT, aT=aT, upT=upT, bias=bias,
                in_features=in_f, out_features=out_f, r=r, rp=rp,
                tn=tn, tk=tk, compute_dtype=compute_dtype)


def merged_linear_weight(w, a_down, b_up, scale):
    """Static-scale inference option: fold LoRA into W once (plain matmul then)."""
    return w + scale * (b_up @ a_down)


def lora_injected_linear_prepared(x, params, scale, *, tm=512, out_dtype=None):
    """x: [M, in]; params from prepare_lora_linear_params; scale: runtime scalar."""
    M, in_f = x.shape
    assert in_f == params["in_features"]
    out_f = params["out_features"]
    out_dtype = out_dtype if out_dtype is not None else x.dtype
    cdt = params["compute_dtype"]
    tn, tk, rp = params["tn"], params["tk"], params["rp"]
    Kp, Np = params["wT"].shape

    tm = min(tm, _round_up(M, 8))
    Mp = _round_up(M, tm)

    # Only pad / cast x when needed (weights were prepped once, offline).
    if (Mp, Kp) == (M, in_f) and x.dtype == cdt:
        xp = x
    else:
        xp = jnp.zeros((Mp, Kp), cdt).at[:M, :in_f].set(x.astype(cdt))

    scale_arr = jnp.asarray(scale, jnp.float32).reshape((1,))
    has_bias = params["bias"] is not None

    grid = (Mp // tm, Np // tn, Kp // tk)

    in_specs = [
        pl.BlockSpec(memory_space=pltpu.MemorySpace.SMEM),       # scale
        pl.BlockSpec((tm, tk), lambda i, j, k: (i, k)),          # x
        pl.BlockSpec((tk, tn), lambda i, j, k: (k, j)),          # W^T
        pl.BlockSpec((tk, rp), lambda i, j, k: (k, 0)),          # A^T
        pl.BlockSpec((rp, tn), lambda i, j, k: (0, j)),          # B_up^T (f32)
    ]
    args = [scale_arr, xp, params["wT"], params["aT"], params["upT"]]
    if has_bias:
        in_specs.append(pl.BlockSpec((1, tn), lambda i, j, k: (0, j)))
        args.append(params["bias"])

    out_padded = pl.pallas_call(
        functools.partial(_lora_linear_kernel, has_bias=has_bias),
        out_shape=jax.ShapeDtypeStruct((Mp, Np), out_dtype),
        grid=grid,
        in_specs=in_specs,
        out_specs=pl.BlockSpec((tm, tn), lambda i, j, k: (i, j)),
        scratch_shapes=[
            pltpu.VMEM((tm, tn), jnp.float32),   # base accumulator
            pltpu.VMEM((tm, rp), jnp.float32),   # LoRA down accumulator
        ],
        compiler_params=pltpu.CompilerParams(
            # i-only megacore sharding: the j==0 down-reuse requires the full
            # j sweep of a given i to run on the same core.
            dimension_semantics=("parallel", "arbitrary", "arbitrary"),
            vmem_limit_bytes=32 * 1024 * 1024,
        ),
    )(*args)

    return out_padded[:M, :out_f]


def lora_injected_linear(x, w, b, a_down, b_up, scale,
                         *, tm=512, tn=512, tk=512, out_dtype=None):
    """Convenience one-shot wrapper (prep + call). Prefer preparing once."""
    params = prepare_lora_linear_params(w, b, a_down, b_up, tn=tn, tk=tk)
    return lora_injected_linear_prepared(x, params, scale, tm=tm,
                                         out_dtype=out_dtype)


if __name__ == "__main__":
    # Small shapes implied by the module: a token batch hitting a Linear.
    batch, seq = 2, 8
    in_features, out_features, r = 32, 32, 4
    scale = 1.0
    M = batch * seq

    key = jax.random.PRNGKey(0)
    kx, kw, ka, kb, kbias = jax.random.split(key, 5)

    x = jax.random.normal(kx, (batch, seq, in_features), dtype=jnp.float32)

    # nn.Linear(in, out, bias=False): weight [out, in].
    bound = in_features ** -0.5
    w = jax.random.uniform(kw, (out_features, in_features),
                           minval=-bound, maxval=bound, dtype=jnp.float32)

    # lora_down ~ Normal(std=1/r), as in the module's __init__.
    a_down = (1.0 / r) * jax.random.normal(
        ka, (r, in_features), dtype=jnp.float32)
    # NOTE: the module zero-inits lora_up; use small random values here so the
    # LoRA branch is exercised (forward semantics are identical).
    b_up = 0.01 * jax.random.normal(kb, (out_features, r), dtype=jnp.float32)
    bias = 0.1 * jax.random.normal(kbias, (out_features,), dtype=jnp.float32)

    x2d = x.reshape(M, in_features)

    # One-time weight prep, then per-call kernel (bias=False default module).
    params = prepare_lora_linear_params(w, None, a_down, b_up)
    out2d = lora_injected_linear_prepared(x2d, params, scale)
    out = out2d.reshape(batch, seq, out_features)
    jax.block_until_ready(out)

    # Reference emulating bf16 MXU inputs / f32 accumulation, f32 up-matmul.
    f32 = jnp.float32
    xb = x2d.astype(jnp.bfloat16).astype(f32)
    wb = w.astype(jnp.bfloat16).astype(f32)
    ab = a_down.astype(jnp.bfloat16).astype(f32)
    down = xb @ ab.T
    ref = xb @ wb.T + scale * (down @ b_up.T)
    assert jnp.allclose(out2d, ref, atol=2e-3, rtol=2e-3), \
        float(jnp.max(jnp.abs(out2d - ref)))

    # scale == 0 path (runtime value, same compiled kernel): base linear only.
    out0 = lora_injected_linear_prepared(x2d, params, 0.0)
    jax.block_until_ready(out0)
    ref0 = xb @ wb.T
    assert jnp.allclose(out0, ref0, atol=2e-3, rtol=2e-3)

    # bias=True variant (trace-time specialization).
    params_b = prepare_lora_linear_params(w, bias, a_down, b_up)
    outb = lora_injected_linear_prepared(x2d, params_b, scale)
    jax.block_until_ready(outb)
    refb = ref + bias[None, :]
    assert jnp.allclose(outb, refb, atol=2e-3, rtol=2e-3)

    print("KERNEL_OK")
</pallas_src>

<mosaic_0001>
module attributes {stable_mosaic.version = 11 : i64} {
  func.func @_lora_linear_kernel(%arg0: i32, %arg1: i32, %arg2: i32, %arg3: memref<1xf32, #tpu.memory_space<smem>>, %arg4: memref<16x128xbf16, #tpu.memory_space<vmem>>, %arg5: memref<128x128xbf16, #tpu.memory_space<vmem>>, %arg6: memref<128x128xbf16, #tpu.memory_space<vmem>>, %arg7: memref<128x128xf32, #tpu.memory_space<vmem>>, %arg8: memref<16x128xf32, #tpu.memory_space<vmem>>, %arg9: memref<16x128xf32, #tpu.memory_space<vmem>>, %arg10: memref<16x128xf32, #tpu.memory_space<vmem>>) attributes {dimension_semantics = [#tpu.dimension_semantics<parallel>, #tpu.dimension_semantics<arbitrary>, #tpu.dimension_semantics<arbitrary>], iteration_bounds = array<i64: 1, 1, 1>, scalar_prefetch = 0 : i64, scratch_operands = 2 : i64, tpu.core_type = #tpu.core_type<tc>, window_params = [{transform_indices = @transform_0, window_bounds = array<i64: 1>}, {transform_indices = @transform_1, window_bounds = array<i64: 16, 128>}, {transform_indices = @transform_2, window_bounds = array<i64: 128, 128>}, {transform_indices = @transform_3, window_bounds = array<i64: 128, 128>}, {transform_indices = @transform_4, window_bounds = array<i64: 128, 128>}, {transform_indices = @transform_5, window_bounds = array<i64: 16, 128>}]} {
    %c0_i32 = arith.constant 0 : i32
    %0 = arith.cmpi eq, %arg2, %c0_i32 : i32
    %1 = arith.extui %0 : i1 to i32
    %c0_i32_0 = arith.constant 0 : i32
    %2 = arith.cmpi ne, %1, %c0_i32_0 : i32
    scf.if %2 {
      %cst_17 = arith.constant 0.000000e+00 : f32
      %23 = vector.broadcast %cst_17 : f32 to vector<16x128xf32>
      %c0_18 = arith.constant 0 : index
      %c0_19 = arith.constant 0 : index
      %24 = vector.load %arg9[%c0_18, %c0_19] : memref<16x128xf32, #tpu.memory_space<vmem>>, vector<16x128xf32>
      tpu.vector_store %arg9[%c0_18, %c0_19], %23 {strides = array<i32>} : memref<16x128xf32, #tpu.memory_space<vmem>>, vector<16x128xf32>,
    } else {
    }
    %c0_i32_1 = arith.constant 0 : i32
    %3 = arith.cmpi eq, %arg2, %c0_i32_1 : i32
    %c0_i32_2 = arith.constant 0 : i32
    %4 = arith.cmpi eq, %arg1, %c0_i32_2 : i32
    %5 = arith.andi %3, %4 : i1
    %6 = arith.extui %5 : i1 to i32
    %c0_i32_3 = arith.constant 0 : i32
    %7 = arith.cmpi ne, %6, %c0_i32_3 : i32
    scf.if %7 {
      %cst_17 = arith.constant 0.000000e+00 : f32
      %23 = vector.broadcast %cst_17 : f32 to vector<16x128xf32>
      %c0_18 = arith.constant 0 : index
      %c0_19 = arith.constant 0 : index
      %24 = vector.load %arg10[%c0_18, %c0_19] : memref<16x128xf32, #tpu.memory_space<vmem>>, vector<16x128xf32>
      tpu.vector_store %arg10[%c0_18, %c0_19], %23 {strides = array<i32>} : memref<16x128xf32, #tpu.memory_space<vmem>>, vector<16x128xf32>,
    } else {
    }
    %c0 = arith.constant 0 : index
    %c0_4 = arith.constant 0 : index
    %8 = vector.load %arg4[%c0, %c0_4] : memref<16x128xbf16, #tpu.memory_space<vmem>>, vector<16x128xbf16>
    %c0_5 = arith.constant 0 : index
    %c0_6 = arith.constant 0 : index
    %9 = vector.load %arg9[%c0_5, %c0_6] : memref<16x128xf32, #tpu.memory_space<vmem>>, vector<16x128xf32>
    %c0_7 = arith.constant 0 : index
    %c0_8 = arith.constant 0 : index
    %10 = vector.load %arg5[%c0_7, %c0_8] : memref<128x128xbf16, #tpu.memory_space<vmem>>, vector<128x128xbf16>
    %cst = arith.constant dense<0.000000e+00> : vector<16x128xf32>
    %11 = tpu.matmul %8, %10, %cst {dimension_numbers = #tpu.dot_dimension_numbers<[1], [0], [0], [1], [0, 0, 1, 1], [], []>} : vector<16x128xbf16>, vector<128x128xbf16>, vector<16x128xf32> -> vector<16x128xf32>
    %12 = arith.addf %9, %11 : vector<16x128xf32>
    %c0_9 = arith.constant 0 : index
    %c0_10 = arith.constant 0 : index
    %13 = vector.load %arg9[%c0_9, %c0_10] : memref<16x128xf32, #tpu.memory_space<vmem>>, vector<16x128xf32>
    tpu.vector_store %arg9[%c0_9, %c0_10], %12 {strides = array<i32>} : memref<16x128xf32, #tpu.memory_space<vmem>>, vector<16x128xf32>,
    %c0_i32_11 = arith.constant 0 : i32
    %14 = arith.cmpi eq, %arg1, %c0_i32_11 : i32
    %c0_12 = arith.constant 0 : index
    %15 = memref.load %arg3[%c0_12] : memref<1xf32, #tpu.memory_space<smem>>
    %cst_13 = arith.constant 0.000000e+00 : f32
    %16 = arith.cmpf one, %15, %cst_13 : f32
    %17 = arith.andi %14, %16 : i1
    %18 = arith.extui %17 : i1 to i32
    %c0_i32_14 = arith.constant 0 : i32
    %19 = arith.cmpi ne, %18, %c0_i32_14 : i32
    scf.if %19 {
      %c0_17 = arith.constant 0 : index
      %c0_18 = arith.constant 0 : index
      %23 = vector.load %arg10[%c0_17, %c0_18] : memref<16x128xf32, #tpu.memory_space<vmem>>, vector<16x128xf32>
      %c0_19 = arith.constant 0 : index
      %c0_20 = arith.constant 0 : index
      %24 = vector.load %arg6[%c0_19, %c0_20] : memref<128x128xbf16, #tpu.memory_space<vmem>>, vector<128x128xbf16>
      %cst_21 = arith.constant dense<0.000000e+00> : vector<16x128xf32>
      %25 = tpu.matmul %8, %24, %cst_21 {dimension_numbers = #tpu.dot_dimension_numbers<[1], [0], [0], [1], [0, 0, 1, 1], [], []>} : vector<16x128xbf16>, vector<128x128xbf16>, vector<16x128xf32> -> vector<16x128xf32>
      %26 = arith.addf %23, %25 : vector<16x128xf32>
      %c0_22 = arith.constant 0 : index
      %c0_23 = arith.constant 0 : index
      %27 = vector.load %arg10[%c0_22, %c0_23] : memref<16x128xf32, #tpu.memory_space<vmem>>, vector<16x128xf32>
      tpu.vector_store %arg10[%c0_22, %c0_23], %26 {strides = array<i32>} : memref<16x128xf32, #tpu.memory_space<vmem>>, vector<16x128xf32>,
    } else {
    }
    %c0_i32_15 = arith.constant 0 : i32
    %20 = arith.cmpi eq, %arg2, %c0_i32_15 : i32
    %21 = arith.extui %20 : i1 to i32
    %c0_i32_16 = arith.constant 0 : i32
    %22 = arith.cmpi ne, %21, %c0_i32_16 : i32
    scf.if %22 {
      %c0_17 = arith.constant 0 : index
      %c0_18 = arith.constant 0 : index
      %23 = vector.load %arg9[%c0_17, %c0_18] : memref<16x128xf32, #tpu.memory_space<vmem>>, vector<16x128xf32>
      %c0_19 = arith.constant 0 : index
      %24 = memref.load %arg3[%c0_19] : memref<1xf32, #tpu.memory_space<smem>>
      %cst_20 = arith.constant 0.000000e+00 : f32
      %25 = arith.cmpf one, %24, %cst_20 : f32
      %26 = arith.extui %25 : i1 to i32
      %c0_i32_21 = arith.constant 0 : i32
      %27 = arith.cmpi ne, %26, %c0_i32_21 : i32
      scf.if %27 {
        %c0_25 = arith.constant 0 : index
        %c0_26 = arith.constant 0 : index
        %32 = vector.load %arg10[%c0_25, %c0_26] : memref<16x128xf32, #tpu.memory_space<vmem>>, vector<16x128xf32>
        %c0_27 = arith.constant 0 : index
        %c0_28 = arith.constant 0 : index
        %33 = vector.load %arg7[%c0_27, %c0_28] : memref<128x128xf32, #tpu.memory_space<vmem>>, vector<128x128xf32>
        %cst_29 = arith.constant dense<0.000000e+00> : vector<16x128xf32>
        %34 = tpu.matmul %32, %33, %cst_29 {dimension_numbers = #tpu.dot_dimension_numbers<[1], [0], [0], [1], [0, 0, 1, 1], [], []>} : vector<16x128xf32>, vector<128x128xf32>, vector<16x128xf32> -> vector<16x128xf32>
        %c0_30 = arith.constant 0 : index
        %35 = memref.load %arg3[%c0_30] : memref<1xf32, #tpu.memory_space<smem>>
        %36 = vector.broadcast %35 : f32 to vector<16x128xf32>
        %37 = arith.mulf %36, %34 : vector<16x128xf32>
        %38 = arith.addf %23, %37 : vector<16x128xf32>
        %c0_31 = arith.constant 0 : index
        %c0_32 = arith.constant 0 : index
        %39 = vector.load %arg8[%c0_31, %c0_32] : memref<16x128xf32, #tpu.memory_space<vmem>>, vector<16x128xf32>
        tpu.vector_store %arg8[%c0_31, %c0_32], %38 {strides = array<i32>} : memref<16x128xf32, #tpu.memory_space<vmem>>, vector<16x128xf32>,
      } else {
      }
      %c0_22 = arith.constant 0 : index
      %28 = memref.load %arg3[%c0_22] : memref<1xf32, #tpu.memory_space<smem>>
      %cst_23 = arith.constant 0.000000e+00 : f32
      %29 = arith.cmpf oeq, %28, %cst_23 : f32
      %30 = arith.extui %29 : i1 to i32
      %c0_i32_24 = arith.constant 0 : i32
      %31 = arith.cmpi ne, %30, %c0_i32_24 : i32
      scf.if %31 {
        %c0_25 = arith.constant 0 : index
        %c0_26 = arith.constant 0 : index
        %32 = vector.load %arg8[%c0_25, %c0_26] : memref<16x128xf32, #tpu.memory_space<vmem>>, vector<16x128xf32>
        tpu.vector_store %arg8[%c0_25, %c0_26], %23 {strides = array<i32>} : memref<16x128xf32, #tpu.memory_space<vmem>>, vector<16x128xf32>,
      } else {
      }
    } else {
    }
    return
  }
  func.func @transform_0(%arg0: i32, %arg1: i32, %arg2: i32) -> i32 {
    %c0_i32 = arith.constant 0 : i32
    %c0_i32_0 = arith.constant 0 : i32
    return %c0_i32 : i32
  }
  func.func @transform_1(%arg0: i32, %arg1: i32, %arg2: i32) -> (i32, i32) {
    %c0_i32 = arith.constant 0 : i32
    return %arg0, %arg2 : i32, i32
  }
  func.func @transform_2(%arg0: i32, %arg1: i32, %arg2: i32) -> (i32, i32) {
    %c0_i32 = arith.constant 0 : i32
    return %arg2, %arg1 : i32, i32
  }
  func.func @transform_3(%arg0: i32, %arg1: i32, %arg2: i32) -> (i32, i32) {
    %c0_i32 = arith.constant 0 : i32
    %c0_i32_0 = arith.constant 0 : i32
    return %arg2, %c0_i32 : i32, i32
  }
  func.func @transform_4(%arg0: i32, %arg1: i32, %arg2: i32) -> (i32, i32) {
    %c0_i32 = arith.constant 0 : i32
    %c0_i32_0 = arith.constant 0 : i32
    return %c0_i32, %arg1 : i32, i32
  }
  func.func @transform_5(%arg0: i32, %arg1: i32, %arg2: i32) -> (i32, i32) {
    %c0_i32 = arith.constant 0 : i32
    return %arg0, %arg1 : i32, i32
  }
}

</mosaic_0001>

<llo_original>
// kernel: tpu_custom_call.1
$region0: #{tpu_custom_call.1}
  #allocation0 [shape = 'u32[]', space=smem, size = 0x4, offset = 0x4, fixed_abs, tag = 'smem constant byte address 0x4 - core index']
  #allocation1 [shape = 'u32[144,128]{1,0:T(1,128)}', space=vmem, size = 0x12000, scoped, tag = 'internal scratch']
  #allocation2 [shape = 'f32[16,128]{1,0:T(8,128)}', space=vmem, size = 0x2000, scoped, tag = 'scratch operand']
  #allocation3 [shape = 'f32[16,128]{1,0:T(8,128)}', space=vmem, size = 0x2000, scoped, tag = 'scratch operand']
  #allocation4 [shape = 'f32[1]{0:T(128)S(6)}', space=smem, size = 0x200, scoped, tag = 'scoped memory for tpu_custom_call.1']
  %s0 = inlined_call_operand.<no memory space> [shape: f32[1], index: 0, kind: input, shape index: {}]
  %s1 = inlined_call_operand.hbm [shape: bf16[16,128], index: 1, kind: input, shape index: {}]
  %s2 = inlined_call_operand.hbm [shape: bf16[128,128], index: 2, kind: input, shape index: {}]
  %s3 = inlined_call_operand.hbm [shape: bf16[128,128], index: 3, kind: input, shape index: {}]
  %s4 = inlined_call_operand.hbm [shape: f32[128,128], index: 4, kind: input, shape index: {}]
  %s5 = inlined_call_operand.hbm [shape: f32[16,128], index: 5, kind: output, shape index: {}]
  %s6 = sld [smem:[#allocation0]]
  $region70: #{tpu_custom_call.1} parent=0
    _
  %s8 = ssub.s32 1, %s6
  %s9 = scalar_select 0, %s8, %s6
  %10 = sst [smem:[#allocation4]] %s0
  $region1: #{tpu_custom_call.1} parent=0
    #allocation5 [shape = 'u8[4096]{0}', space=vmem, size = 0x1000, scoped, tag = 'input window, operand 1, single buffered']
    #allocation6 [shape = 's32[1]{0}', space=sflag, size = 0x4, scoped, tag = 'scoped memory for tpu_custom_call.1']
    #allocation7 [shape = 's32[1]{0}', space=sflag, size = 0x4, scoped, tag = 'scoped memory for tpu_custom_call.1']
    #allocation8 [shape = 'u8[32768]{0}', space=vmem, size = 0x8000, scoped, tag = 'input window, operand 2, single buffered']
    #allocation9 [shape = 's32[1]{0}', space=sflag, size = 0x4, scoped, tag = 'scoped memory for tpu_custom_call.1']
    #allocation10 [shape = 'u8[32768]{0}', space=vmem, size = 0x8000, scoped, tag = 'input window, operand 3, single buffered']
    #allocation11 [shape = 'u8[65536]{0}', space=vmem, size = 0x10000, scoped, tag = 'input window, operand 4, single buffered']
    #allocation12 [shape = 's32[1]{0}', space=sflag, size = 0x4, scoped, tag = 'scoped memory for tpu_custom_call.1']
    #allocation13 [shape = 'u8[8192]{0}', space=vmem, size = 0x2000, scoped, tag = 'output window, operand 0, single buffered']
    %11 = vsyncpa [#allocation6], 0
    %12 = vsyncpa [#allocation9], 0
    %13 = vsyncpa [#allocation12], 0
    %14 = vsyncpa [#allocation7], 0
    // Predicated region
    $region2: #{tpu_custom_call.1} parent=1 // pred_check
      _
    $region3: #{tpu_custom_call.1} parent=1 // pred_check_branch
      %16 = sbr.rel (0) target = $region5
    $region4: #{tpu_custom_call.1} parent=1 // pred_region
      _
    $region5: #{tpu_custom_call.1} parent=1 // pred_fallthru
      _
    // Predicated region
    $region6: #{tpu_custom_call.1} parent=1 // pred_check
      _
    $region7: #{tpu_custom_call.1} parent=1 // pred_check_branch
      %18 = sbr.rel (0) target = $region9
    $region8: #{tpu_custom_call.1} parent=1 // pred_region
      %s20 = ssub.s32 128, 128
      %21 = vsyncadd [#allocation6], %s20
      %s22 = sshll.u32 [#allocation5], 4
      %s23 = int_to_ptr.vmem [resolvable:$true] %s22
      %28 = dma.hbm_to_vmem [thread:$0]  %s1, 128, %s23, [#allocation6], 64, 64, 4
    $region9: #{tpu_custom_call.1} parent=1 // pred_fallthru
      _
    // Predicated region
    $region10: #{tpu_custom_call.1} parent=1 // pred_check
      _
    $region11: #{tpu_custom_call.1} parent=1 // pred_check_branch
      %30 = sbr.rel (0) target = $region13
    $region12: #{tpu_custom_call.1} parent=1 // pred_region
      %s32 = ssub.s32 1024, 1024
      %33 = vsyncadd [#allocation9], %s32
      %s34 = sshll.u32 [#allocation8], 4
      %s35 = int_to_ptr.vmem [resolvable:$true] %s34
      %40 = dma.hbm_to_vmem [thread:$0]  %s2, 1024, %s35, [#allocation9], 64, 64, 4
    $region13: #{tpu_custom_call.1} parent=1 // pred_fallthru
      _
    // Predicated region
    $region14: #{tpu_custom_call.1} parent=1 // pred_check
      _
    $region15: #{tpu_custom_call.1} parent=1 // pred_check_branch
      %42 = sbr.rel (0) target = $region17
    $region16: #{tpu_custom_call.1} parent=1 // pred_region
      %s44 = ssub.s32 1024, 1024
      %45 = vsyncadd [#allocation9], %s44
      %s46 = sshll.u32 [#allocation10], 4
      %s47 = int_to_ptr.vmem [resolvable:$true] %s46
      %52 = dma.hbm_to_vmem [thread:$0]  %s3, 1024, %s47, [#allocation9], 64, 64, 4
    $region17: #{tpu_custom_call.1} parent=1 // pred_fallthru
      _
    // Predicated region
    $region18: #{tpu_custom_call.1} parent=1 // pred_check
      _
    $region19: #{tpu_custom_call.1} parent=1 // pred_check_branch
      %54 = sbr.rel (0) target = $region21
    $region20: #{tpu_custom_call.1} parent=1 // pred_region
      %s56 = ssub.s32 2048, 2048
      %57 = vsyncadd [#allocation12], %s56
      %s58 = sshll.u32 [#allocation11], 4
      %s59 = int_to_ptr.vmem [resolvable:$true] %s58
      %64 = dma.hbm_to_vmem [thread:$0]  %s4, 2048, %s59, [#allocation12], 128, 128, 8
    $region21: #{tpu_custom_call.1} parent=1 // pred_fallthru
      _
    // Predicated region
    $region22: #{tpu_custom_call.1} parent=1 // pred_check
      _
    $region23: #{tpu_custom_call.1} parent=1 // pred_check_branch
      %66 = sbr.rel (0) target = $region25
    $region24: #{tpu_custom_call.1} parent=1 // pred_region
      %67 = dma.done [#allocation6], 128
    $region25: #{tpu_custom_call.1} parent=1 // pred_fallthru
      _
    // Predicated region
    $region26: #{tpu_custom_call.1} parent=1 // pred_check
      _
    $region27: #{tpu_custom_call.1} parent=1 // pred_check_branch
      %69 = sbr.rel (0) target = $region29
    $region28: #{tpu_custom_call.1} parent=1 // pred_region
      %70 = dma.done [#allocation9], 1024
    $region29: #{tpu_custom_call.1} parent=1 // pred_fallthru
      _
    // Predicated region
    $region30: #{tpu_custom_call.1} parent=1 // pred_check
      _
    $region31: #{tpu_custom_call.1} parent=1 // pred_check_branch
      %72 = sbr.rel (0) target = $region33
    $region32: #{tpu_custom_call.1} parent=1 // pred_region
      %73 = dma.done [#allocation9], 1024
    $region33: #{tpu_custom_call.1} parent=1 // pred_fallthru
      _
    // Predicated region
    $region34: #{tpu_custom_call.1} parent=1 // pred_check
      _
    $region35: #{tpu_custom_call.1} parent=1 // pred_check_branch
      %75 = sbr.rel (0) target = $region37
    $region36: #{tpu_custom_call.1} parent=1 // pred_region
      %76 = dma.done [#allocation12], 2048
    $region37: #{tpu_custom_call.1} parent=1 // pred_fallthru
      _
    %p78 = scmp.eq.s32.totalorder 0, 0
    // Predicated region
    $region38: #{tpu_custom_call.1} parent=1 // pred_check
      %p79 = pneg %p78
    $region39: #{tpu_custom_call.1} parent=1 // pred_check_branch
      %81 = sbr.rel (%p79) target = $region41
    $region40: #{tpu_custom_call.1} parent=1 // pred_region
      %82 = vst [vmem:[#allocation2] sm:$0xff] 0.0
      %83 = vst [vmem:[#allocation2 + $0x8] sm:$0xff] 0.0
    $region41: #{tpu_custom_call.1} parent=1 // pred_fallthru
      _
    %p84 = scmp.eq.s32.totalorder 0, 0
    %p85 = pnand %p78, %p84
    %p86 = pneg %p85
    // Predicated region
    $region42: #{tpu_custom_call.1} parent=1 // pred_check
      _
    $region43: #{tpu_custom_call.1} parent=1 // pred_check_branch
      %88 = sbr.rel (%p85) target = $region45
    $region44: #{tpu_custom_call.1} parent=1 // pred_region
      %89 = vst [vmem:[#allocation3] sm:$0xff] 0.0
      %90 = vst [vmem:[#allocation3 + $0x8] sm:$0xff] 0.0
    $region45: #{tpu_custom_call.1} parent=1 // pred_fallthru
      _
    %v91 = vld [vmem:[#allocation5] sm:$0xf]
    %v92 = vld [vmem:[#allocation5 + $0x4] sm:$0xf]
    %v93 = vld [vmem:[#allocation2] sm:$0xff]
    %v94 = vld [vmem:[#allocation2 + $0x8] sm:$0xff]
    %v95 = vld [vmem:[#allocation8] sm:$0xf]
    %v96 = vld [vmem:[#allocation8 + $0x4] sm:$0xf]
    %v97 = vld [vmem:[#allocation8 + $0x8] sm:$0xf]
    %v98 = vld [vmem:[#allocation8 + $0xc] sm:$0xf]
    %v99 = vld [vmem:[#allocation8 + $0x10] sm:$0xf]
    %v100 = vld [vmem:[#allocation8 + $0x14] sm:$0xf]
    %v101 = vld [vmem:[#allocation8 + $0x18] sm:$0xf]
    %v102 = vld [vmem:[#allocation8 + $0x1c] sm:$0xf]
    %v103 = vld [vmem:[#allocation8 + $0x20] sm:$0xf]
    %v104 = vld [vmem:[#allocation8 + $0x24] sm:$0xf]
    %v105 = vld [vmem:[#allocation8 + $0x28] sm:$0xf]
    %v106 = vld [vmem:[#allocation8 + $0x2c] sm:$0xf]
    %v107 = vld [vmem:[#allocation8 + $0x30] sm:$0xf]
    %v108 = vld [vmem:[#allocation8 + $0x34] sm:$0xf]
    %v109 = vld [vmem:[#allocation8 + $0x38] sm:$0xf]
    %v110 = vld [vmem:[#allocation8 + $0x3c] sm:$0xf]
    %v113 = vunpack.c.l.b16 %v91
    %v114 = vunpack.c.l.b16 %v92
    %v115 = vpack.c.b16 %v114, %v113
    %v133 = vunpack.c.l.b16 %v95
    %v134 = vunpack.c.l.b16 %v96
    %v135 = vunpack.c.l.b16 %v97
    %v136 = vunpack.c.l.b16 %v98
    %v137 = vunpack.c.l.b16 %v99
    %v138 = vunpack.c.l.b16 %v100
    %v139 = vunpack.c.l.b16 %v101
    %v140 = vunpack.c.l.b16 %v102
    %v141 = vunpack.c.l.b16 %v103
    %v142 = vunpack.c.l.b16 %v104
    %v143 = vunpack.c.l.b16 %v105
    %v144 = vunpack.c.l.b16 %v106
    %v145 = vunpack.c.l.b16 %v107
    %v146 = vunpack.c.l.b16 %v108
    %v147 = vunpack.c.l.b16 %v109
    %v148 = vunpack.c.l.b16 %v110
    %v149 = vpack.c.b16 %v134, %v133
    %v150 = vpack.c.b16 %v136, %v135
    %v151 = vpack.c.b16 %v138, %v137
    %v152 = vpack.c.b16 %v140, %v139
    %v153 = vpack.c.b16 %v142, %v141
    %v154 = vpack.c.b16 %v144, %v143
    %v155 = vpack.c.b16 %v146, %v145
    %v156 = vpack.c.b16 %v148, %v147
    %165 = vmatprep.subr.bf16.mxu0 0
    %166 = vmatpush1.bf16.msra.mxu0 %v149
    %167 = vmatprep.subr.bf16.mxu0 0
    %168 = vmatpush1.bf16.msra.mxu0 %v150
    %169 = vmatprep.subr.bf16.mxu0 0
    %170 = vmatpush1.bf16.msra.mxu0 %v151
    %171 = vmatprep.subr.bf16.mxu0 0
    %172 = vmatpush1.bf16.msra.mxu0 %v152
    %173 = vmatprep.subr.bf16.mxu0 0
    %174 = vmatpush1.bf16.msra.mxu0 %v153
    %175 = vmatprep.subr.bf16.mxu0 0
    %176 = vmatpush1.bf16.msra.mxu0 %v154
    %177 = vmatprep.subr.bf16.mxu0 0
    %178 = vmatpush1.bf16.msra.mxu0 %v155
    %179 = vmatprep.subr.bf16.mxu0 0
    %180 = vmatpush1.bf16.msra.mxu0 %v156
    %181 = vmatprep.subr.bf16.mxu0 0
    %182 = vmatpush1.bf16.msra.mxu0 0
    %183 = vmatprep.subr.bf16.mxu0 0
    %184 = vmatpush1.bf16.msra.mxu0 0
    %185 = vmatprep.subr.bf16.mxu0 0
    %186 = vmatpush1.bf16.msra.mxu0 0
    %187 = vmatprep.subr.bf16.mxu0 0
    %188 = vmatpush1.bf16.msra.mxu0 0
    %189 = vmatprep.subr.bf16.mxu0 0
    %190 = vmatpush1.bf16.msra.mxu0 0
    %191 = vmatprep.subr.bf16.mxu0 0
    %192 = vmatpush1.bf16.msra.mxu0 0
    %193 = vmatprep.subr.bf16.mxu0 0
    %194 = vmatpush1.bf16.msra.mxu0 0
    %195 = vmatprep.subr.bf16.mxu0 0
    %196 = vmatpush1.bf16.msra.mxu0 0
    %197 = vmatprep.mubr.bf16.mxu0 0
    %198 = vmatmul.mubr.bf16.gmra.mrb[0].mxu0 %v115
    %v199 = vpop.f32.mrb[0].mxu0
    %v200 = vadd.f32 0.0, %v199
    %v201 = vpop.f32.mrb[0].mxu0
    %v202 = vpop.f32.mrb[0].mxu0
    %v203 = vadd.f32 0.0, %v202
    %v204 = vpop.f32.mrb[0].mxu0
    %205 = vdwg.mxu0
    %v206 = vadd.f32 %v93, %v200
    %v207 = vadd.f32 %v94, %v203
    %208 = vst [vmem:[#allocation2] sm:$0xff] %v206
    %209 = vst [vmem:[#allocation2 + $0x8] sm:$0xff] %v207
    %s210 = sld [smem:[#allocation4]]
    %p211 = scmp.ne.f32.partialorder %s210, 0.0
    %p212 = pnand %p84, %p211
    %p213 = pneg %p212
    // Predicated region
    $region46: #{tpu_custom_call.1} parent=1 // pred_check
      _
    $region47: #{tpu_custom_call.1} parent=1 // pred_check_branch
      %215 = sbr.rel (%p212) target = $region49
    $region48: #{tpu_custom_call.1} parent=1 // pred_region
      %v216 = vld [vmem:[#allocation3] sm:$0xff]
      %v217 = vld [vmem:[#allocation3 + $0x8] sm:$0xff]
      %v218 = vld [vmem:[#allocation10] sm:$0xf]
      %v219 = vld [vmem:[#allocation10 + $0x4] sm:$0xf]
      %v220 = vld [vmem:[#allocation10 + $0x8] sm:$0xf]
      %v221 = vld [vmem:[#allocation10 + $0xc] sm:$0xf]
      %v222 = vld [vmem:[#allocation10 + $0x10] sm:$0xf]
      %v223 = vld [vmem:[#allocation10 + $0x14] sm:$0xf]
      %v224 = vld [vmem:[#allocation10 + $0x18] sm:$0xf]
      %v225 = vld [vmem:[#allocation10 + $0x1c] sm:$0xf]
      %v226 = vld [vmem:[#allocation10 + $0x20] sm:$0xf]
      %v227 = vld [vmem:[#allocation10 + $0x24] sm:$0xf]
      %v228 = vld [vmem:[#allocation10 + $0x28] sm:$0xf]
      %v229 = vld [vmem:[#allocation10 + $0x2c] sm:$0xf]
      %v230 = vld [vmem:[#allocation10 + $0x30] sm:$0xf]
      %v231 = vld [vmem:[#allocation10 + $0x34] sm:$0xf]
      %v232 = vld [vmem:[#allocation10 + $0x38] sm:$0xf]
      %v233 = vld [vmem:[#allocation10 + $0x3c] sm:$0xf]
      %v250 = vunpack.c.l.b16 %v218
      %v251 = vunpack.c.l.b16 %v219
      %v252 = vunpack.c.l.b16 %v220
      %v253 = vunpack.c.l.b16 %v221
      %v254 = vunpack.c.l.b16 %v222
      %v255 = vunpack.c.l.b16 %v223
      %v256 = vunpack.c.l.b16 %v224
      %v257 = vunpack.c.l.b16 %v225
      %v258 = vunpack.c.l.b16 %v226
      %v259 = vunpack.c.l.b16 %v227
      %v260 = vunpack.c.l.b16 %v228
      %v261 = vunpack.c.l.b16 %v229
      %v262 = vunpack.c.l.b16 %v230
      %v263 = vunpack.c.l.b16 %v231
      %v264 = vunpack.c.l.b16 %v232
      %v265 = vunpack.c.l.b16 %v233
      %v266 = vpack.c.b16 %v251, %v250
      %v267 = vpack.c.b16 %v253, %v252
      %v268 = vpack.c.b16 %v255, %v254
      %v269 = vpack.c.b16 %v257, %v256
      %v270 = vpack.c.b16 %v259, %v258
      %v271 = vpack.c.b16 %v261, %v260
      %v272 = vpack.c.b16 %v263, %v262
      %v273 = vpack.c.b16 %v265, %v264
      %282 = vmatprep.subr.bf16.mxu0 0
      %283 = vmatpush1.bf16.msra.mxu0 %v266
      %284 = vmatprep.subr.bf16.mxu0 0
      %285 = vmatpush1.bf16.msra.mxu0 %v267
      %286 = vmatprep.subr.bf16.mxu0 0
      %287 = vmatpush1.bf16.msra.mxu0 %v268
      %288 = vmatprep.subr.bf16.mxu0 0
      %289 = vmatpush1.bf16.msra.mxu0 %v269
      %290 = vmatprep.subr.bf16.mxu0 0
      %291 = vmatpush1.bf16.msra.mxu0 %v270
      %292 = vmatprep.subr.bf16.mxu0 0
      %293 = vmatpush1.bf16.msra.mxu0 %v271
      %294 = vmatprep.subr.bf16.mxu0 0
      %295 = vmatpush1.bf16.msra.mxu0 %v272
      %296 = vmatprep.subr.bf16.mxu0 0
      %297 = vmatpush1.bf16.msra.mxu0 %v273
      %298 = vmatprep.subr.bf16.mxu0 0
      %299 = vmatpush1.bf16.msra.mxu0 0
      %300 = vmatprep.subr.bf16.mxu0 0
      %301 = vmatpush1.bf16.msra.mxu0 0
      %302 = vmatprep.subr.bf16.mxu0 0
      %303 = vmatpush1.bf16.msra.mxu0 0
      %304 = vmatprep.subr.bf16.mxu0 0
      %305 = vmatpush1.bf16.msra.mxu0 0
      %306 = vmatprep.subr.bf16.mxu0 0
      %307 = vmatpush1.bf16.msra.mxu0 0
      %308 = vmatprep.subr.bf16.mxu0 0
      %309 = vmatpush1.bf16.msra.mxu0 0
      %310 = vmatprep.subr.bf16.mxu0 0
      %311 = vmatpush1.bf16.msra.mxu0 0
      %312 = vmatprep.subr.bf16.mxu0 0
      %313 = vmatpush1.bf16.msra.mxu0 0
      %314 = vmatprep.mubr.bf16.mxu0 0
      %315 = vmatmul.mubr.bf16.gmra.mrb[0].mxu0 %v115
      %v316 = vpop.f32.mrb[0].mxu0
      %v317 = vadd.f32 0.0, %v316
      %v318 = vpop.f32.mrb[0].mxu0
      %v319 = vpop.f32.mrb[0].mxu0
      %v320 = vadd.f32 0.0, %v319
      %v321 = vpop.f32.mrb[0].mxu0
      %322 = vdwg.mxu0
      %v323 = vadd.f32 %v216, %v317
      %v324 = vadd.f32 %v217, %v320
      %325 = vst [vmem:[#allocation3] sm:$0xff] %v323
      %326 = vst [vmem:[#allocation3 + $0x8] sm:$0xff] %v324
    $region49: #{tpu_custom_call.1} parent=1 // pred_fallthru
      _
    // Predicated region
    $region50: #{tpu_custom_call.1} parent=1 // pred_check
      %p327 = pneg %p78
    $region51: #{tpu_custom_call.1} parent=1 // pred_check_branch
      %329 = sbr.rel (%p327) target = $region53
    $region52: #{tpu_custom_call.1} parent=1 // pred_region
      %v330 = vld [vmem:[#allocation2] sm:$0xff]
      %v331 = vld [vmem:[#allocation2 + $0x8] sm:$0xff]
      %s332 = sld [smem:[#allocation4]]
      %p333 = scmp.ne.f32.partialorder %s332, 0.0
      // Predicated region
      $region54: #{tpu_custom_call.1} parent=52 // pred_check
        %p334 = pneg %p333
      $region55: #{tpu_custom_call.1} parent=52 // pred_check_branch
        %336 = sbr.rel (%p334) target = $region57
      $region56: #{tpu_custom_call.1} parent=52 // pred_region
        %v337 = vld [vmem:[#allocation3] sm:$0xff]
        %v338 = vld [vmem:[#allocation3 + $0x8] sm:$0xff]
        %v339 = vld [vmem:[#allocation11] sm:$0xff]
        %v340 = vld [vmem:[#allocation11 + $0x8] sm:$0xff]
        %v341 = vld [vmem:[#allocation11 + $0x10] sm:$0xff]
        %v342 = vld [vmem:[#allocation11 + $0x18] sm:$0xff]
        %v343 = vld [vmem:[#allocation11 + $0x20] sm:$0xff]
        %v344 = vld [vmem:[#allocation11 + $0x28] sm:$0xff]
        %v345 = vld [vmem:[#allocation11 + $0x30] sm:$0xff]
        %v346 = vld [vmem:[#allocation11 + $0x38] sm:$0xff]
        %v347 = vld [vmem:[#allocation11 + $0x40] sm:$0xff]
        %v348 = vld [vmem:[#allocation11 + $0x48] sm:$0xff]
        %v349 = vld [vmem:[#allocation11 + $0x50] sm:$0xff]
        %v350 = vld [vmem:[#allocation11 + $0x58] sm:$0xff]
        %v351 = vld [vmem:[#allocation11 + $0x60] sm:$0xff]
        %v352 = vld [vmem:[#allocation11 + $0x68] sm:$0xff]
        %v353 = vld [vmem:[#allocation11 + $0x70] sm:$0xff]
        %v354 = vld [vmem:[#allocation11 + $0x78] sm:$0xff]
        %355 = vmatprep.subr.mxu0 0.0
        %356 = vmatpush1.msra.mxu0 %v339
        %357 = vmatprep.subr.mxu0 0.0
        %358 = vmatpush1.msra.mxu0 %v340
        %359 = vmatprep.subr.mxu0 0.0
        %360 = vmatpush1.msra.mxu0 %v341
        %361 = vmatprep.subr.mxu0 0.0
        %362 = vmatpush1.msra.mxu0 %v342
        %363 = vmatprep.subr.mxu0 0.0
        %364 = vmatpush1.msra.mxu0 %v343
        %365 = vmatprep.subr.mxu0 0.0
        %366 = vmatpush1.msra.mxu0 %v344
        %367 = vmatprep.subr.mxu0 0.0
        %368 = vmatpush1.msra.mxu0 %v345
        %369 = vmatprep.subr.mxu0 0.0
        %370 = vmatpush1.msra.mxu0 %v346
        %371 = vmatprep.subr.mxu0 0.0
        %372 = vmatpush1.msra.mxu0 %v347
        %373 = vmatprep.subr.mxu0 0.0
        %374 = vmatpush1.msra.mxu0 %v348
        %375 = vmatprep.subr.mxu0 0.0
        %376 = vmatpush1.msra.mxu0 %v349
        %377 = vmatprep.subr.mxu0 0.0
        %378 = vmatpush1.msra.mxu0 %v350
        %379 = vmatprep.subr.mxu0 0.0
        %380 = vmatpush1.msra.mxu0 %v351
        %381 = vmatprep.subr.mxu0 0.0
        %382 = vmatpush1.msra.mxu0 %v352
        %383 = vmatprep.subr.mxu0 0.0
        %384 = vmatpush1.msra.mxu0 %v353
        %385 = vmatprep.subr.mxu0 0.0
        %386 = vmatpush1.msra.mxu0 %v354
        %387 = vmatprep.subr.mxu0 0.0
        %388 = vmatpush1.msra.mxu0 0.0
        %389 = vmatprep.subr.mxu0 0.0
        %390 = vmatpush1.msra.mxu0 0.0
        %391 = vmatprep.subr.mxu0 0.0
        %392 = vmatpush1.msra.mxu0 0.0
        %393 = vmatprep.subr.mxu0 0.0
        %394 = vmatpush1.msra.mxu0 0.0
        %395 = vmatprep.subr.mxu0 0.0
        %396 = vmatpush1.msra.mxu0 0.0
        %397 = vmatprep.subr.mxu0 0.0
        %398 = vmatpush1.msra.mxu0 0.0
        %399 = vmatprep.subr.mxu0 0.0
        %400 = vmatpush1.msra.mxu0 0.0
        %401 = vmatprep.subr.mxu0 0.0
        %402 = vmatpush1.msra.mxu0 0.0
        %403 = vmatprep.subr.mxu0 0.0
        %404 = vmatpush1.msra.mxu0 0.0
        %405 = vmatprep.subr.mxu0 0.0
        %406 = vmatpush1.msra.mxu0 0.0
        %407 = vmatprep.subr.mxu0 0.0
        %408 = vmatpush1.msra.mxu0 0.0
        %409 = vmatprep.subr.mxu0 0.0
        %410 = vmatpush1.msra.mxu0 0.0
        %411 = vmatprep.subr.mxu0 0.0
        %412 = vmatpush1.msra.mxu0 0.0
        %413 = vmatprep.subr.mxu0 0.0
        %414 = vmatpush1.msra.mxu0 0.0
        %415 = vmatprep.subr.mxu0 0.0
        %416 = vmatpush1.msra.mxu0 0.0
        %417 = vmatprep.subr.mxu0 0.0
        %418 = vmatpush1.msra.mxu0 0.0
        %419 = vmatprep.mubr.f32.mxu0 0.0
        %420 = vmatmul.mubr.f32.gmra.mrb[0].mxu0 %v337
        %v421 = vpop.f32.mrb[0].mxu0
        %v422 = vadd.f32 0.0, %v421
        %v423 = vpop.f32.mrb[0].mxu0
        %424 = vmatprep.mubr.f32.mxu0 0.0
        %425 = vmatmul.mubr.f32.gmra.mrb[0].mxu0 %v338
        %v426 = vpop.f32.mrb[0].mxu0
        %v427 = vadd.f32 0.0, %v426
        %v428 = vpop.f32.mrb[0].mxu0
        %429 = vdwg.mxu0
        %s430 = sld [smem:[#allocation4]]
        %v431 = vstv %s430
        %v432 = vmul.f32 %v431, %v422
        %v433 = vmul.f32 %v431, %v427
        %v434 = vadd.f32 %v330, %v432
        %v435 = vadd.f32 %v331, %v433
        %436 = vst [vmem:[#allocation13] sm:$0xff] %v434
        %437 = vst [vmem:[#allocation13 + $0x8] sm:$0xff] %v435
      $region57: #{tpu_custom_call.1} parent=52 // pred_fallthru
        _
      %s438 = sld [smem:[#allocation4]]
      %p439 = scmp.eq.f32.partialorder %s438, 0.0
      // Predicated region
      $region58: #{tpu_custom_call.1} parent=52 // pred_check
        %p440 = pneg %p439
      $region59: #{tpu_custom_call.1} parent=52 // pred_check_branch
        %442 = sbr.rel (%p440) target = $region61
      $region60: #{tpu_custom_call.1} parent=52 // pred_region
        %443 = vst [vmem:[#allocation13] sm:$0xff] %v330
        %444 = vst [vmem:[#allocation13 + $0x8] sm:$0xff] %v331
      $region61: #{tpu_custom_call.1} parent=52 // pred_fallthru
        _
    $region53: #{tpu_custom_call.1} parent=1 // pred_fallthru
      _
    // Predicated region
    $region62: #{tpu_custom_call.1} parent=1 // pred_check
      _
    $region63: #{tpu_custom_call.1} parent=1 // pred_check_branch
      %446 = sbr.rel (0) target = $region65
    $region64: #{tpu_custom_call.1} parent=1 // pred_region
      %s448 = ssub.s32 256, 256
      %449 = vsyncadd [#allocation7], %s448
      %s450 = sshll.u32 [#allocation13], 4
      %s451 = int_to_ptr.vmem [resolvable:$true] %s450
      %456 = dma.vmem_to_hbm [thread:$0]  %s451, 256, %s5, [#allocation7], 128, 128, 8
    $region65: #{tpu_custom_call.1} parent=1 // pred_fallthru
      _
    // Predicated region
    $region66: #{tpu_custom_call.1} parent=1 // pred_check
      _
    $region67: #{tpu_custom_call.1} parent=1 // pred_check_branch
      %458 = sbr.rel (0) target = $region69
    $region68: #{tpu_custom_call.1} parent=1 // pred_region
      %459 = dma.done [#allocation7], 256
    $region69: #{tpu_custom_call.1} parent=1 // pred_fallthru
      _
    %460 = vsyncpa [#allocation6], 1
    %461 = vsyncpa [#allocation9], 1
    %462 = vsyncpa [#allocation12], 1
    %463 = vsyncpa [#allocation7], 1

</llo_original>
